<compile_context>
chip_gen: v5e
topology: v5e:2x2
jax: 0.10.0
libtpu: 0.0.40
codegen_flags: <defaults>
</compile_context>

<pallas_src>
import functools

import jax
import jax.numpy as jnp
from jax.experimental import pallas as pl
from jax.experimental.pallas import tpu as pltpu

EPS = 1e-5
ALPHA = 0.2


def _round_up(a, b):
    return (a + b - 1) // b * b


def _cdiv(a, b):
    return (a + b - 1) // b


@functools.lru_cache(maxsize=None)
def _vmem_budgets():
    """Per-generation scoped-VMEM limit and per-step tile budget (bytes)."""
    try:
        cap = int(pltpu.get_tpu_info().vmem_capacity_bytes)
    except Exception:                      # conservative (v7x-sized) fallback
        cap = 64 * 1024 * 1024
    vmem_limit = min(cap * 3 // 4, 100 * 1024 * 1024)   # ~96-100MiB v5e/v6e, ~48MiB v7x
    tile_budget = int(vmem_limit * 0.45)                # ~40-45MiB / ~21MiB
    return vmem_limit, tile_budget


# ---------------------------------------------------------------------------
# Pass A: conv as ka*ka shifted MXU matmuls (bf16 in, f32 acc) + partial
# BatchNorm statistics over the valid rows.  y is stored bf16.
# ---------------------------------------------------------------------------
def conv_stats_kernel(xs_ref, w_ref, mask_ref, y_ref, s_ref, *, tn, ka, gq, gw):
    # xs_ref  : (tn, Gs, 4*C_in)  bf16   flattened phase grid per image
    # w_ref   : (ka*ka, 4*C_in, Cp) bf16 reordered conv weight
    # mask_ref: (Gq, 1) f32              1.0 on valid output rows, 0.0 on garbage
    # y_ref   : (tn, Gq, Cp) bf16        conv result (garbage rows included)
    # s_ref   : (1, 2, Cp) f32           per-tile [sum; sum of squares]
    cp = w_ref.shape[-1]
    mask = mask_ref[...]
    csum = jnp.zeros((1, cp), jnp.float32)
    csq = jnp.zeros((1, cp), jnp.float32)
    for im in range(tn):                         # small static unroll
        acc = jnp.zeros((gq, cp), jnp.float32)
        for a in range(ka):
            for b in range(ka):
                off = a * gw + b                 # constant flat shift
                acc = acc + jnp.dot(xs_ref[im, off:off + gq, :],
                                    w_ref[a * ka + b],
                                    preferred_element_type=jnp.float32)
        y_ref[im] = acc.astype(y_ref.dtype)      # bf16 intermediate store
        accm = acc * mask
        csum = csum + jnp.sum(accm, axis=0, keepdims=True)
        csq = csq + jnp.sum(accm * acc, axis=0, keepdims=True)
    s_ref[0, 0:1, :] = csum                      # direct row stores (no concat)
    s_ref[0, 1:2, :] = csq


# ---------------------------------------------------------------------------
# Pass B: BatchNorm affine (pre-folded scale/shift) + LeakyReLU(0.2).
# bf16 is only the storage dtype; the VPU math is f32 (v5e has no bf16 VALU).
# ---------------------------------------------------------------------------
def bn_lrelu_kernel(y_ref, scale_ref, shift_ref, o_ref):
    z = y_ref[...].astype(jnp.float32) * scale_ref[...] + shift_ref[...]
    o_ref[...] = jnp.where(z > 0, z, ALPHA * z).astype(o_ref.dtype)


def _space_to_depth_s2(x, pad, gh, gw, gs):
    """(N,C,H,W) -> (N, Gs, 4*C) bf16: stride-2 phase repack of the padded
    input, flattened (i,j) grid per image plus trailing zero rows (>= halo)."""
    n, c, _, _ = x.shape
    xp = jnp.pad(x, ((0, 0), (0, 0), (pad, pad), (pad, pad)))
    xp = xp[:, :, :2 * gh, :2 * gw]
    xs = xp.reshape(n, c, gh, 2, gw, 2)          # (n, ci, i, p, j, q)
    xs = xs.transpose(0, 2, 4, 3, 5, 1)          # (n, i, j, p, q, ci)
    xs = xs.reshape(n, gh * gw, 4 * c).astype(jnp.bfloat16)
    return jnp.pad(xs, ((0, 0), (0, gs - gh * gw), (0, 0)))


def _reorder_weight(weight, k, cp):
    """(C_out, C_in, k, k) OIHW -> (ka*ka, 4*C_in, Cp) bf16, matching the
    phase-packed input channel order (p, q, ci)."""
    c_out, c_in = weight.shape[0], weight.shape[1]
    ka = k // 2
    wr = weight.reshape(c_out, c_in, ka, 2, ka, 2)   # (o, ci, a, p, b, q)
    wr = wr.transpose(2, 4, 3, 5, 1, 0)              # (a, b, p, q, ci, o)
    wr = wr.reshape(ka * ka, 4 * c_in, c_out).astype(jnp.bfloat16)
    return jnp.pad(wr, ((0, 0), (0, 0), (0, cp - c_out)))


@functools.partial(jax.jit, static_argnames=("k", "stride", "pad", "out_layout"))
def d_block_forward(x, weight, gamma, beta, *, k=4, stride=2, pad=1,
                    out_layout="NCHW"):
    """x: (N, C_in, H, W) NCHW; weight: (C_out, C_in, k, k) (PyTorch OIHW)."""
    assert stride == 2 and k % 2 == 0, "kernel assumes stride=2 and even k"
    n, c_in, h, w = x.shape
    c_out = weight.shape[0]
    ka = k // 2
    ho = (h + 2 * pad - k) // stride + 1
    wo = (w + 2 * pad - k) // stride + 1
    gh, gw = ho + ka - 1, wo + ka - 1
    gq = _round_up((ho - 1) * gw + wo, 8)            # computed rows / image
    gs = _round_up(gq + (ka - 1) * (gw + 1), 8)      # stored rows / image (+halo)
    cin4 = 4 * c_in
    cp = _round_up(c_out, 128)

    vmem_limit, tile_budget = _vmem_budgets()

    # --- image-tile size for Pass A (weight double-buffer + f32 acc counted).
    w_bytes = 2 * 2 * ka * ka * cin4 * cp
    acc_bytes = 2 * 4 * gq * cp
    per_img = 2 * (gs * cin4 * 2 + gq * cp * 2)      # xs + y, double-buffered
    tn = max(1, min((max(tile_budget - w_bytes - acc_bytes, per_img)) // per_img, 8))
    if n >= 2:
        tn = min(tn, max(1, n // 2))                 # >=2 grid steps (v7x 2 TCs)
    tn = int(tn)
    n_pad = _round_up(n, tn)                         # zero images: no stat impact
    num_tiles = n_pad // tn

    xs = _space_to_depth_s2(x, pad, gh, gw, gs)
    if n_pad > n:
        xs = jnp.pad(xs, ((0, n_pad - n), (0, 0), (0, 0)))
    w_mat = _reorder_weight(weight, k, cp)
    g = jnp.pad(gamma.astype(jnp.float32), (0, cp - c_out))
    bb = jnp.pad(beta.astype(jnp.float32), (0, cp - c_out))

    t = jnp.arange(gq, dtype=jnp.int32)
    mask = (((t % gw) < wo) & ((t // gw) < ho)).astype(jnp.float32).reshape(gq, 1)

    cparams = pltpu.CompilerParams(
        dimension_semantics=("parallel",), vmem_limit_bytes=vmem_limit)

    kern_a = functools.partial(conv_stats_kernel, tn=tn, ka=ka, gq=gq, gw=gw)
    y, stats = pl.pallas_call(
        kern_a,
        out_shape=(jax.ShapeDtypeStruct((n_pad, gq, cp), jnp.bfloat16),
                   jax.ShapeDtypeStruct((num_tiles, 2, cp), jnp.float32)),
        grid=(num_tiles,),
        in_specs=[
            pl.BlockSpec((tn, gs, cin4), lambda i: (i, 0, 0)),
            pl.BlockSpec((ka * ka, cin4, cp), lambda i: (0, 0, 0)),
            pl.BlockSpec((gq, 1), lambda i: (0, 0)),
        ],
        out_specs=(
            pl.BlockSpec((tn, gq, cp), lambda i: (i, 0, 0)),
            pl.BlockSpec((1, 2, cp), lambda i: (i, 0, 0)),
        ),
        compiler_params=cparams,
    )(xs, w_mat, mask)

    # --- BatchNorm2d training statistics (biased variance over N*Ho*Wo),
    # folded with gamma/beta into per-channel scale/shift (f32).
    # TODO(synk): one-pass E[y^2]-E[y]^2 can cancel if |mean| >> std; fine for
    # DCGAN activations, switch to a shifted two-pass form if that changes.
    m = n * ho * wo
    total = jnp.sum(stats, axis=0)
    mean = total[0] / m
    var = jnp.maximum(total[1] / m - mean * mean, 0.0)
    inv_std = jax.lax.rsqrt(var + EPS)
    scale = (g * inv_std).reshape(1, cp)
    shift = (bb - mean * g * inv_std).reshape(1, cp)

    # --- Pass B: streaming normalize + LeakyReLU over the flat (rows, Cp)
    # view (layout-trivial reshape) with its own, larger tile.
    m_all = n_pad * gq
    y2 = y.reshape(m_all, cp)
    per_row_b = 2 * cp * (2 + 4)                     # bf16 in + x.dtype out, x2 buf
    tm_b = max(8, min((tile_budget // per_row_b) // 8 * 8, 32768))
    if m_all >= 16:
        tm_b = min(tm_b, _round_up(_cdiv(m_all, 2), 8))   # >=2 steps for v7x
    tm_b = min(tm_b, _round_up(m_all, 8))
    grid_b = _cdiv(m_all, tm_b)

    out2 = pl.pallas_call(
        bn_lrelu_kernel,
        out_shape=jax.ShapeDtypeStruct((m_all, cp), x.dtype),
        grid=(grid_b,),
        in_specs=[
            pl.BlockSpec((tm_b, cp), lambda i: (i, 0)),
            pl.BlockSpec((1, cp), lambda i: (0, 0)),
            pl.BlockSpec((1, cp), lambda i: (0, 0)),
        ],
        out_specs=pl.BlockSpec((tm_b, cp), lambda i: (i, 0)),
        compiler_params=cparams,
    )(y2, scale, shift)

    # --- drop garbage rows / padded channels; NHWC is the cheap layout.
    out3 = out2.reshape(n_pad, gq, cp)[:n]
    rows = ho * gw
    if gq >= rows:
        out3 = out3[:, :rows]
    else:
        out3 = jnp.pad(out3, ((0, 0), (0, rows - gq), (0, 0)))
    out = out3.reshape(n, ho, gw, cp)[:, :, :wo, :c_out]
    if out_layout == "NHWC":
        return out
    # NCHW at the module boundary to match the PyTorch spec; chained D_blocks
    # should request out_layout="NHWC" to skip this HBM round-trip.
    return out.transpose(0, 3, 1, 2)


def _reference(x, weight, gamma, beta, *, k=4, stride=2, pad=1):
    """Plain-JAX f32 reference for the sanity check."""
    y = jax.lax.conv_general_dilated(
        x.astype(jnp.float32), weight.astype(jnp.float32),
        window_strides=(stride, stride), padding=((pad, pad), (pad, pad)),
        dimension_numbers=("NCHW", "OIHW", "NCHW"))
    mean = y.mean(axis=(0, 2, 3), keepdims=True)
    var = ((y - mean) ** 2).mean(axis=(0, 2, 3), keepdims=True)
    y_hat = (y - mean) / jnp.sqrt(var + EPS)
    y_hat = y_hat * gamma.reshape(1, -1, 1, 1) + beta.reshape(1, -1, 1, 1)
    return jnp.where(y_hat > 0, y_hat, ALPHA * y_hat)


if __name__ == "__main__":
    key = jax.random.PRNGKey(0)
    kx, kw = jax.random.split(key)

    N, C_IN, H, W = 2, 3, 16, 16
    C_OUT, K = 8, 4

    x = jax.random.normal(kx, (N, C_IN, H, W), dtype=jnp.float32)
    weight = 0.1 * jax.random.normal(kw, (C_OUT, C_IN, K, K), dtype=jnp.float32)
    gamma = jnp.ones((C_OUT,), dtype=jnp.float32)
    beta = jnp.zeros((C_OUT,), dtype=jnp.float32)

    out = d_block_forward(x, weight, gamma, beta)
    out = jax.block_until_ready(out)

    ref = _reference(x, weight, gamma, beta)
    assert out.shape == (N, C_OUT, H // 2, W // 2), out.shape
    err = float(jnp.max(jnp.abs(out - ref)))
    # bf16 MXU operands + bf16 conv intermediate -> looser tolerance vs f32 ref.
    assert jnp.allclose(out, ref, atol=5e-2, rtol=5e-2), err

    print("KERNEL_OK")
</pallas_src>

<mosaic_0001>
module attributes {stable_mosaic.version = 11 : i64} {
  func.func @bn_lrelu_kernel(%arg0: i32, %arg1: memref<72x128xbf16, #tpu.memory_space<vmem>>, %arg2: memref<1x128xf32, #tpu.memory_space<vmem>>, %arg3: memref<1x128xf32, #tpu.memory_space<vmem>>, %arg4: memref<72x128xf32, #tpu.memory_space<vmem>>) attributes {dimension_semantics = [#tpu.dimension_semantics<parallel>], iteration_bounds = array<i64: 2>, scalar_prefetch = 0 : i64, scratch_operands = 0 : i64, tpu.core_type = #tpu.core_type<tc>, window_params = [{transform_indices = @transform_0, window_bounds = array<i64: 72, 128>}, {pipeline_mode = #tpu.pipeline_mode<synchronous>, transform_indices = @transform_1, window_bounds = array<i64: 1, 128>}, {pipeline_mode = #tpu.pipeline_mode<synchronous>, transform_indices = @transform_2, window_bounds = array<i64: 1, 128>}, {transform_indices = @transform_3, window_bounds = array<i64: 72, 128>}]} {
    %c0 = arith.constant 0 : index
    %c0_0 = arith.constant 0 : index
    %0 = vector.load %arg1[%c0, %c0_0] : memref<72x128xbf16, #tpu.memory_space<vmem>>, vector<72x128xbf16>
    %1 = arith.extf %0 : vector<72x128xbf16> to vector<72x128xf32>
    %c0_1 = arith.constant 0 : index
    %c0_2 = arith.constant 0 : index
    %2 = vector.load %arg2[%c0_1, %c0_2] : memref<1x128xf32, #tpu.memory_space<vmem>>, vector<1x128xf32>
    %3 = vector.broadcast %2 : vector<1x128xf32> to vector<72x128xf32>
    %4 = arith.mulf %1, %3 : vector<72x128xf32>
    %c0_3 = arith.constant 0 : index
    %c0_4 = arith.constant 0 : index
    %5 = vector.load %arg3[%c0_3, %c0_4] : memref<1x128xf32, #tpu.memory_space<vmem>>, vector<1x128xf32>
    %6 = vector.broadcast %5 : vector<1x128xf32> to vector<72x128xf32>
    %7 = arith.addf %4, %6 : vector<72x128xf32>
    %cst = arith.constant 0.000000e+00 : f32
    %8 = vector.broadcast %cst : f32 to vector<72x128xf32>
    %9 = arith.cmpf ogt, %7, %8 : vector<72x128xf32>
    %cst_5 = arith.constant 2.000000e-01 : f32
    %10 = vector.broadcast %cst_5 : f32 to vector<72x128xf32>
    %11 = arith.mulf %10, %7 : vector<72x128xf32>
    %12 = arith.select %9, %7, %11 : vector<72x128xi1>, vector<72x128xf32>
    %c0_6 = arith.constant 0 : index
    %c0_7 = arith.constant 0 : index
    %13 = vector.load %arg4[%c0_6, %c0_7] : memref<72x128xf32, #tpu.memory_space<vmem>>, vector<72x128xf32>
    tpu.vector_store %arg4[%c0_6, %c0_7], %12 {strides = array<i32>} : memref<72x128xf32, #tpu.memory_space<vmem>>, vector<72x128xf32>,
    return
  }
  func.func @transform_0(%arg0: i32) -> (i32, i32) {
    %c0_i32 = arith.constant 0 : i32
    %c0_i32_0 = arith.constant 0 : i32
    return %arg0, %c0_i32 : i32, i32
  }
  func.func @transform_1(%arg0: i32) -> (i32, i32) {
    %c0_i32 = arith.constant 0 : i32
    %c0_i32_0 = arith.constant 0 : i32
    %c0_i32_1 = arith.constant 0 : i32
    return %c0_i32, %c0_i32_0 : i32, i32
  }
  func.func @transform_2(%arg0: i32) -> (i32, i32) {
    %c0_i32 = arith.constant 0 : i32
    %c0_i32_0 = arith.constant 0 : i32
    %c0_i32_1 = arith.constant 0 : i32
    return %c0_i32, %c0_i32_0 : i32, i32
  }
  func.func @transform_3(%arg0: i32) -> (i32, i32) {
    %c0_i32 = arith.constant 0 : i32
    %c0_i32_0 = arith.constant 0 : i32
    return %arg0, %c0_i32 : i32, i32
  }
}

module attributes {stable_mosaic.version = 11 : i64} {
  func.func @conv_stats_kernel(%arg0: i32, %arg1: memref<1x88x12xbf16, #tpu.memory_space<vmem>>, %arg2: memref<4x12x128xbf16, #tpu.memory_space<vmem>>, %arg3: memref<72x1xf32, #tpu.memory_space<vmem>>, %arg4: memref<1x72x128xbf16, #tpu.memory_space<vmem>>, %arg5: memref<1x2x128xf32, #tpu.memory_space<vmem>>) attributes {dimension_semantics = [#tpu.dimension_semantics<parallel>], iteration_bounds = array<i64: 2>, scalar_prefetch = 0 : i64, scratch_operands = 0 : i64, tpu.core_type = #tpu.core_type<tc>, window_params = [{transform_indices = @transform_0, window_bounds = array<i64: 1, 88, 12>}, {pipeline_mode = #tpu.pipeline_mode<synchronous>, transform_indices = @transform_1, window_bounds = array<i64: 4, 12, 128>}, {pipeline_mode = #tpu.pipeline_mode<synchronous>, transform_indices = @transform_2, window_bounds = array<i64: 72, 1>}, {transform_indices = @transform_3, window_bounds = array<i64: 1, 72, 128>}, {transform_indices = @transform_4, window_bounds = array<i64: 1, 2, 128>}]} {
    %c0 = arith.constant 0 : index
    %c0_0 = arith.constant 0 : index
    %0 = vector.load %arg3[%c0, %c0_0] : memref<72x1xf32, #tpu.memory_space<vmem>>, vector<72x1xf32>
    %cst = arith.constant 0.000000e+00 : f32
    %1 = vector.broadcast %cst : f32 to vector<1x128xf32>
    %cst_1 = arith.constant 0.000000e+00 : f32
    %2 = vector.broadcast %cst_1 : f32 to vector<1x128xf32>
    %cst_2 = arith.constant 0.000000e+00 : f32
    %3 = vector.broadcast %cst_2 : f32 to vector<72x128xf32>
    %c0_3 = arith.constant 0 : index
    %c0_4 = arith.constant 0 : index
    %c0_5 = arith.constant 0 : index
    %4 = vector.load %arg1[%c0_3, %c0_4, %c0_5] : memref<1x88x12xbf16, #tpu.memory_space<vmem>>, vector<1x72x12xbf16>
    %5 = vector.shape_cast %4 : vector<1x72x12xbf16> to vector<72x12xbf16>
    %c0_6 = arith.constant 0 : index
    %c0_7 = arith.constant 0 : index
    %c0_8 = arith.constant 0 : index
    %6 = vector.load %arg2[%c0_6, %c0_7, %c0_8] : memref<4x12x128xbf16, #tpu.memory_space<vmem>>, vector<1x12x128xbf16>
    %7 = vector.shape_cast %6 : vector<1x12x128xbf16> to vector<12x128xbf16>
    %cst_9 = arith.constant dense<0.000000e+00> : vector<72x128xf32>
    %8 = tpu.matmul %5, %7, %cst_9 {dimension_numbers = #tpu.dot_dimension_numbers<[1], [0], [0], [1], [0, 0, 1, 1], [], []>} : vector<72x12xbf16>, vector<12x128xbf16>, vector<72x128xf32> -> vector<72x128xf32>
    %9 = arith.addf %3, %8 : vector<72x128xf32>
    %c0_10 = arith.constant 0 : index
    %c1 = arith.constant 1 : index
    %c0_11 = arith.constant 0 : index
    %10 = vector.load %arg1[%c0_10, %c1, %c0_11] : memref<1x88x12xbf16, #tpu.memory_space<vmem>>, vector<1x72x12xbf16>
    %11 = vector.shape_cast %10 : vector<1x72x12xbf16> to vector<72x12xbf16>
    %c1_12 = arith.constant 1 : index
    %c0_13 = arith.constant 0 : index
    %c0_14 = arith.constant 0 : index
    %12 = vector.load %arg2[%c1_12, %c0_13, %c0_14] : memref<4x12x128xbf16, #tpu.memory_space<vmem>>, vector<1x12x128xbf16>
    %13 = vector.shape_cast %12 : vector<1x12x128xbf16> to vector<12x128xbf16>
    %cst_15 = arith.constant dense<0.000000e+00> : vector<72x128xf32>
    %14 = tpu.matmul %11, %13, %cst_15 {dimension_numbers = #tpu.dot_dimension_numbers<[1], [0], [0], [1], [0, 0, 1, 1], [], []>} : vector<72x12xbf16>, vector<12x128xbf16>, vector<72x128xf32> -> vector<72x128xf32>
    %15 = arith.addf %9, %14 : vector<72x128xf32>
    %c0_16 = arith.constant 0 : index
    %c9 = arith.constant 9 : index
    %c0_17 = arith.constant 0 : index
    %16 = vector.load %arg1[%c0_16, %c9, %c0_17] : memref<1x88x12xbf16, #tpu.memory_space<vmem>>, vector<1x72x12xbf16>
    %17 = vector.shape_cast %16 : vector<1x72x12xbf16> to vector<72x12xbf16>
    %c2 = arith.constant 2 : index
    %c0_18 = arith.constant 0 : index
    %c0_19 = arith.constant 0 : index
    %18 = vector.load %arg2[%c2, %c0_18, %c0_19] : memref<4x12x128xbf16, #tpu.memory_space<vmem>>, vector<1x12x128xbf16>
    %19 = vector.shape_cast %18 : vector<1x12x128xbf16> to vector<12x128xbf16>
    %cst_20 = arith.constant dense<0.000000e+00> : vector<72x128xf32>
    %20 = tpu.matmul %17, %19, %cst_20 {dimension_numbers = #tpu.dot_dimension_numbers<[1], [0], [0], [1], [0, 0, 1, 1], [], []>} : vector<72x12xbf16>, vector<12x128xbf16>, vector<72x128xf32> -> vector<72x128xf32>
    %21 = arith.addf %15, %20 : vector<72x128xf32>
    %c0_21 = arith.constant 0 : index
    %c10 = arith.constant 10 : index
    %c0_22 = arith.constant 0 : index
    %22 = vector.load %arg1[%c0_21, %c10, %c0_22] : memref<1x88x12xbf16, #tpu.memory_space<vmem>>, vector<1x72x12xbf16>
    %23 = vector.shape_cast %22 : vector<1x72x12xbf16> to vector<72x12xbf16>
    %c3 = arith.constant 3 : index
    %c0_23 = arith.constant 0 : index
    %c0_24 = arith.constant 0 : index
    %24 = vector.load %arg2[%c3, %c0_23, %c0_24] : memref<4x12x128xbf16, #tpu.memory_space<vmem>>, vector<1x12x128xbf16>
    %25 = vector.shape_cast %24 : vector<1x12x128xbf16> to vector<12x128xbf16>
    %cst_25 = arith.constant dense<0.000000e+00> : vector<72x128xf32>
    %26 = tpu.matmul %23, %25, %cst_25 {dimension_numbers = #tpu.dot_dimension_numbers<[1], [0], [0], [1], [0, 0, 1, 1], [], []>} : vector<72x12xbf16>, vector<12x128xbf16>, vector<72x128xf32> -> vector<72x128xf32>
    %27 = arith.addf %21, %26 : vector<72x128xf32>
    %28 = arith.truncf %27 : vector<72x128xf32> to vector<72x128xbf16>
    %c0_26 = arith.constant 0 : index
    %c0_27 = arith.constant 0 : index
    %c0_28 = arith.constant 0 : index
    %29 = vector.load %arg4[%c0_26, %c0_27, %c0_28] : memref<1x72x128xbf16, #tpu.memory_space<vmem>>, vector<1x72x128xbf16>
    %30 = vector.shape_cast %29 : vector<1x72x128xbf16> to vector<72x128xbf16>
    %31 = vector.shape_cast %28 : vector<72x128xbf16> to vector<1x72x128xbf16>
    tpu.vector_store %arg4[%c0_26, %c0_27, %c0_28], %31 {strides = array<i32>} : memref<1x72x128xbf16, #tpu.memory_space<vmem>>, vector<1x72x128xbf16>,
    %32 = vector.broadcast %0 : vector<72x1xf32> to vector<72x128xf32>
    %33 = arith.mulf %27, %32 : vector<72x128xf32>
    %cst_29 = arith.constant dense<0.000000e+00> : vector<128xf32>
    %34 = vector.multi_reduction <add>, %33, %cst_29 [0] : vector<72x128xf32> to vector<128xf32>
    %35 = vector.shape_cast %34 : vector<128xf32> to vector<1x128xf32>
    %36 = arith.addf %1, %35 : vector<1x128xf32>
    %37 = arith.mulf %33, %27 : vector<72x128xf32>
    %cst_30 = arith.constant dense<0.000000e+00> : vector<128xf32>
    %38 = vector.multi_reduction <add>, %37, %cst_30 [0] : vector<72x128xf32> to vector<128xf32>
    %39 = vector.shape_cast %38 : vector<128xf32> to vector<1x128xf32>
    %40 = arith.addf %2, %39 : vector<1x128xf32>
    %c0_31 = arith.constant 0 : index
    %c0_32 = arith.constant 0 : index
    %c0_33 = arith.constant 0 : index
    %41 = vector.load %arg5[%c0_31, %c0_32, %c0_33] : memref<1x2x128xf32, #tpu.memory_space<vmem>>, vector<1x1x128xf32>
    %42 = vector.shape_cast %41 : vector<1x1x128xf32> to vector<1x128xf32>
    %43 = vector.shape_cast %36 : vector<1x128xf32> to vector<1x1x128xf32>
    tpu.vector_store %arg5[%c0_31, %c0_32, %c0_33], %43 {strides = array<i32>} : memref<1x2x128xf32, #tpu.memory_space<vmem>>, vector<1x1x128xf32>,
    %c0_34 = arith.constant 0 : index
    %c1_35 = arith.constant 1 : index
    %c0_36 = arith.constant 0 : index
    %44 = vector.load %arg5[%c0_34, %c1_35, %c0_36] : memref<1x2x128xf32, #tpu.memory_space<vmem>>, vector<1x1x128xf32>
    %45 = vector.shape_cast %44 : vector<1x1x128xf32> to vector<1x128xf32>
    %46 = vector.shape_cast %40 : vector<1x128xf32> to vector<1x1x128xf32>
    tpu.vector_store %arg5[%c0_34, %c1_35, %c0_36], %46 {strides = array<i32>} : memref<1x2x128xf32, #tpu.memory_space<vmem>>, vector<1x1x128xf32>,
    return
  }
  func.func @transform_0(%arg0: i32) -> (i32, i32, i32) {
    %c0_i32 = arith.constant 0 : i32
    %c0_i32_0 = arith.constant 0 : i32
    %c0_i32_1 = arith.constant 0 : i32
    return %arg0, %c0_i32, %c0_i32_0 : i32, i32, i32
  }
  func.func @transform_1(%arg0: i32) -> (i32, i32, i32) {
    %c0_i32 = arith.constant 0 : i32
    %c0_i32_0 = arith.constant 0 : i32
    %c0_i32_1 = arith.constant 0 : i32
    %c0_i32_2 = arith.constant 0 : i32
    return %c0_i32, %c0_i32_0, %c0_i32_1 : i32, i32, i32
  }
  func.func @transform_2(%arg0: i32) -> (i32, i32) {
    %c0_i32 = arith.constant 0 : i32
    %c0_i32_0 = arith.constant 0 : i32
    %c0_i32_1 = arith.constant 0 : i32
    return %c0_i32, %c0_i32_0 : i32, i32
  }
  func.func @transform_3(%arg0: i32) -> (i32, i32, i32) {
    %c0_i32 = arith.constant 0 : i32
    %c0_i32_0 = arith.constant 0 : i32
    %c0_i32_1 = arith.constant 0 : i32
    return %arg0, %c0_i32, %c0_i32_0 : i32, i32, i32
  }
  func.func @transform_4(%arg0: i32) -> (i32, i32, i32) {
    %c0_i32 = arith.constant 0 : i32
    %c0_i32_0 = arith.constant 0 : i32
    %c0_i32_1 = arith.constant 0 : i32
    return %arg0, %c0_i32, %c0_i32_0 : i32, i32, i32
  }
}

</mosaic_0001>

<llo_original>
// kernel: d_block_forward.3
$region0: #{d_block_forward.3}
  #allocation0 [shape = 'u32[]', space=smem, size = 0x4, offset = 0x4, fixed_abs, tag = 'smem constant byte address 0x4 - core index']
  #allocation1 [shape = 'u32[72,128]{1,0:T(1,128)}', space=vmem, size = 0x9000, scoped, tag = 'internal scratch']
  %s0 = inlined_call_operand.vmem [shape: bf16[144,128], index: 0, kind: input, shape index: {}]
  %s1 = inlined_call_operand.vmem [shape: f32[1,128], index: 1, kind: input, shape index: {}]
  %s2 = inlined_call_operand.vmem [shape: f32[1,128], index: 2, kind: input, shape index: {}]
  %s3 = inlined_call_operand.vmem [shape: f32[144,128], index: 3, kind: output, shape index: {}]
  %s4 = sld [smem:[#allocation0]]
  $region45: #{d_block_forward.3} parent=0
    _
  %s6 = ssub.s32 1, %s4
  %s7 = scalar_select 0, %s6, %s4
  loop: start=0, step=1, limit=4
  $region2: #{d_block_forward.3} parent=0 // loop_pre_header
    _
  $region3: #{d_block_forward.3} parent=0 // loop_header
    %s9 = sphi 0, %s13
    %p10 = scmp.ge.s32.totalorder %s9, 4
    %s19 = sphi 0, %s21
    %s22 = sphi 0, %s19
    %s23 = sphi 0, %s22
    %s39 = sphi 0, %s23
    %s43 = sphi 0, %s43
    %s45 = sphi 0, %s43
    %s46 = sphi 0, %s45
    %s60 = sphi 0, %s46
    %s64 = sphi 0, %s64
    %s66 = sphi 0, %s64
    %s67 = sphi 0, %s66
    %s81 = sphi 0, %s67
    %s87 = sphi 0, %s89
    %s90 = sphi 0, %s87
    %s91 = sphi 0, %s90
    %s107 = sphi 0, %s91
  $region4: #{d_block_forward.3} parent=0 // loop_header_branch
    %12 = sbr.rel (%p10) target = $region8
  $region5: #{d_block_forward.3} parent=0 // loop_body
    %s14 = ssub.s32 %s9, 1
    %s15 = ssub.s32 %s9, 2
    %s16 = sadd.s32 %s9, 1
    %s17 = ssub.s32 %s9, %s16
    %p18 = scmp.eq.s32.totalorder %s17, 0
    %s20 = sadd.s32 %s19, 1
    %s21 = scalar_select %p18, %s19, %s20
    %p24 = pneg %p18
    %p25 = scmp.eq.s32.totalorder %s9, 1
    %p26 = por %p24, %p25
    %p27 = scmp.ne.s32.totalorder %s19, %s22
    %p28 = scmp.eq.s32.totalorder %s9, 0
    %p29 = por %p27, %p28
    %p30 = scmp.ne.s32.totalorder %s19, %s22
    %p31 = scmp.eq.s32.totalorder %s14, 1
    %p32 = por %p30, %p31
    %p33 = scmp.ne.s32.totalorder %s22, %s23
    %p34 = scmp.eq.s32.totalorder %s14, 0
    %p35 = por %p33, %p34
    %p36 = scmp.ne.s32.totalorder %s22, %s23
    %p37 = scmp.eq.s32.totalorder %s15, 1
    %p38 = por %p36, %p37
    %p40 = scmp.ne.s32.totalorder %s23, %s39
    %p41 = scmp.eq.s32.totalorder %s15, 0
    %p42 = por %p40, %p41
    %s44 = sadd.s32 %s43, 1
    %p47 = scmp.eq.s32.totalorder %s9, 1
    %p48 = scmp.ne.s32.totalorder %s43, %s45
    %p49 = scmp.eq.s32.totalorder %s9, 0
    %p50 = por %p48, %p49
    %p51 = scmp.ne.s32.totalorder %s43, %s45
    %p52 = scmp.eq.s32.totalorder %s14, 1
    %p53 = por %p51, %p52
    %p54 = scmp.ne.s32.totalorder %s45, %s46
    %p55 = scmp.eq.s32.totalorder %s14, 0
    %p56 = por %p54, %p55
    %p57 = scmp.ne.s32.totalorder %s45, %s46
    %p58 = scmp.eq.s32.totalorder %s15, 1
    %p59 = por %p57, %p58
    %p61 = scmp.ne.s32.totalorder %s46, %s60
    %p62 = scmp.eq.s32.totalorder %s15, 0
    %p63 = por %p61, %p62
    %s65 = sadd.s32 %s64, 1
    %p68 = scmp.eq.s32.totalorder %s9, 1
    %p69 = scmp.ne.s32.totalorder %s64, %s66
    %p70 = scmp.eq.s32.totalorder %s9, 0
    %p71 = por %p69, %p70
    %p72 = scmp.ne.s32.totalorder %s64, %s66
    %p73 = scmp.eq.s32.totalorder %s14, 1
    %p74 = por %p72, %p73
    %p75 = scmp.ne.s32.totalorder %s66, %s67
    %p76 = scmp.eq.s32.totalorder %s14, 0
    %p77 = por %p75, %p76
    %p78 = scmp.ne.s32.totalorder %s66, %s67
    %p79 = scmp.eq.s32.totalorder %s15, 1
    %p80 = por %p78, %p79
    %p82 = scmp.ne.s32.totalorder %s67, %s81
    %p83 = scmp.eq.s32.totalorder %s15, 0
    %p84 = por %p82, %p83
    %s85 = ssub.s32 %s9, %s16
    %p86 = scmp.eq.s32.totalorder %s85, 0
    %s88 = sadd.s32 %s87, 1
    %s89 = scalar_select %p86, %s87, %s88
    %p92 = pneg %p86
    %p93 = scmp.eq.s32.totalorder %s9, 1
    %p94 = por %p92, %p93
    %p95 = scmp.ne.s32.totalorder %s87, %s90
    %p96 = scmp.eq.s32.totalorder %s9, 0
    %p97 = por %p95, %p96
    %p98 = scmp.ne.s32.totalorder %s87, %s90
    %p99 = scmp.eq.s32.totalorder %s14, 1
    %p100 = por %p98, %p99
    %p101 = scmp.ne.s32.totalorder %s90, %s91
    %p102 = scmp.eq.s32.totalorder %s14, 0
    %p103 = por %p101, %p102
    %p104 = scmp.ne.s32.totalorder %s90, %s91
    %p105 = scmp.eq.s32.totalorder %s15, 1
    %p106 = por %p104, %p105
    %p108 = scmp.ne.s32.totalorder %s91, %s107
    %p109 = scmp.eq.s32.totalorder %s15, 0
    %p110 = por %p108, %p109
    %p111 = scmp.le.s32.totalorder 1, %s9
    %p112 = scmp.lt.s32.totalorder %s9, 3
    %p113 = pnand %p111, %p112
    %p114 = pneg %p113
    // Predicated region
    $region9: #{d_block_forward.3} parent=5 // pred_check
      _
    $region10: #{d_block_forward.3} parent=5 // pred_check_branch
      %116 = sbr.rel (%p113) target = $region12
    $region11: #{d_block_forward.3} parent=5 // pred_region
      %s117 = ssub.s32 %s9, 1
      // Predicated region
      $region13: #{d_block_forward.3} parent=11 // pred_check
        %p118 = pneg %p56
      $region14: #{d_block_forward.3} parent=11 // pred_check_branch
        %120 = sbr.rel (%p118) target = $region16
      $region15: #{d_block_forward.3} parent=11 // pred_region
        _
      $region16: #{d_block_forward.3} parent=11 // pred_fallthru
        _
      // Predicated region
      $region17: #{d_block_forward.3} parent=11 // pred_check
        %p121 = pneg %p77
      $region18: #{d_block_forward.3} parent=11 // pred_check_branch
        %123 = sbr.rel (%p121) target = $region20
      $region19: #{d_block_forward.3} parent=11 // pred_region
        _
      $region20: #{d_block_forward.3} parent=11 // pred_fallthru
        _
    $region12: #{d_block_forward.3} parent=5 // pred_fallthru
      _
    %p124 = scmp.lt.s32.totalorder %s9, 2
    // Predicated region
    $region21: #{d_block_forward.3} parent=5 // pred_check
      %p125 = pneg %p124
    $region22: #{d_block_forward.3} parent=5 // pred_check_branch
      %127 = sbr.rel (%p125) target = $region24
    $region23: #{d_block_forward.3} parent=5 // pred_region
      // Predicated region
      $region25: #{d_block_forward.3} parent=23 // pred_check
        %p128 = pneg %p29
      $region26: #{d_block_forward.3} parent=23 // pred_check_branch
        %130 = sbr.rel (%p128) target = $region28
      $region27: #{d_block_forward.3} parent=23 // pred_region
        %s131 = smul.u32 9, %s9
        %p132 = scmp.lt.s32.totalorder %s131, 17
        %s133 = scalar_select %p132, %s131, 17
        %s134 = smul.addr %s133, 4
        %s135 = scalar_lea.vmem %s0, %s134
        %s136 = smul.u32 9, %s9
      $region28: #{d_block_forward.3} parent=23 // pred_fallthru
        _
    $region24: #{d_block_forward.3} parent=5 // pred_fallthru
      _
    %p137 = scmp.le.s32.totalorder 1, %s9
    %p138 = scmp.lt.s32.totalorder %s9, 3
    %p139 = pnand %p137, %p138
    %p140 = pneg %p139
    // Predicated region
    $region29: #{d_block_forward.3} parent=5 // pred_check
      _
    $region30: #{d_block_forward.3} parent=5 // pred_check_branch
      %142 = sbr.rel (%p139) target = $region32
    $region31: #{d_block_forward.3} parent=5 // pred_region
      %s143 = ssub.s32 %s9, 1
      %s144 = smul.u32 9, %s14
      %p145 = scmp.lt.s32.totalorder %s144, 17
      %s146 = scalar_select %p145, %s144, 17
      %s147 = smul.addr %s146, 4
      %s148 = scalar_lea.vmem %s0, %s147
      %p149 = pneg %p35
      %p150 = pneg %p32
      %p151 = pneg %p56
      %p152 = pneg %p53
      %p153 = pneg %p77
      %p154 = pneg %p74
      %p155 = pneg %p103
      %p156 = pneg %p100
      %s157 = smul.u32 9, %s14
      %p158 = scmp.lt.s32.totalorder %s157, 17
      %s159 = scalar_select %p158, %s157, 17
      %s160 = smul.addr %s159, 8
      %s161 = scalar_lea.vmem %s3, %s160
      %s162 = smul.u32 9, %s14
      %p163 = scmp.lt.s32.totalorder %s162, 17
      %s164 = scalar_select %p163, %s162, 17
      %s165 = smul.addr %s164, 4
      %s166 = scalar_lea.vmem %s0, %s165
      %s167 = smul.u32 9, %s14
      %s168 = smul.u32 9, %s14
      %p169 = scmp.lt.s32.totalorder %s168, 17
      %s170 = scalar_select %p169, %s168, 17
      %s171 = smul.addr %s170, 8
      %s172 = scalar_lea.vmem %s3, %s171
      %s173 = smul.u32 9, %s14
      %v174 = vld [vmem:[%s166] sm:$0xf]
      %v175 = vld [vmem:[%s166 + $0x4] sm:$0xf]
      %v176 = vld [vmem:[%s166 + $0x8] sm:$0xf]
      %v177 = vld [vmem:[%s166 + $0xc] sm:$0xf]
      %v178 = vld [vmem:[%s166 + $0x10] sm:$0xf]
      %v179 = vld [vmem:[%s166 + $0x14] sm:$0xf]
      %v180 = vld [vmem:[%s166 + $0x18] sm:$0xf]
      %v181 = vld [vmem:[%s166 + $0x1c] sm:$0xf]
      %v182 = vld [vmem:[%s166 + $0x20] sm:$0xf]
      %v183 = vunpack.c.l.bf16 %v174
      %v184 = vunpack.c.l.bf16 %v175
      %v185 = vunpack.c.l.bf16 %v176
      %v186 = vunpack.c.l.bf16 %v177
      %v187 = vunpack.c.l.bf16 %v178
      %v188 = vunpack.c.l.bf16 %v179
      %v189 = vunpack.c.l.bf16 %v180
      %v190 = vunpack.c.l.bf16 %v181
      %v191 = vunpack.c.l.bf16 %v182
      %v192 = vld [vmem:[%s1] sm:$0x1]
      %v194 = vperm.slane %v192, 0
      %v196 = vmul.f32 %v183, %v194
      %v197 = vmul.f32 %v184, %v194
      %v198 = vmul.f32 %v185, %v194
      %v199 = vmul.f32 %v186, %v194
      %v200 = vmul.f32 %v187, %v194
      %v201 = vmul.f32 %v188, %v194
      %v202 = vmul.f32 %v189, %v194
      %v203 = vmul.f32 %v190, %v194
      %v204 = vmul.f32 %v191, %v194
      %v205 = vld [vmem:[%s2] sm:$0x1]
      %v207 = vperm.slane %v205, 0
      %v209 = vadd.f32 %v196, %v207
      %v210 = vadd.f32 %v197, %v207
      %v211 = vadd.f32 %v198, %v207
      %v212 = vadd.f32 %v199, %v207
      %v213 = vadd.f32 %v200, %v207
      %v214 = vadd.f32 %v201, %v207
      %v215 = vadd.f32 %v202, %v207
      %v216 = vadd.f32 %v203, %v207
      %v217 = vadd.f32 %v204, %v207
      %vm218 = vcmp.gt.f32.partialorder %v209, 0.0
      %vm219 = vcmp.gt.f32.partialorder %v210, 0.0
      %vm220 = vcmp.gt.f32.partialorder %v211, 0.0
      %vm221 = vcmp.gt.f32.partialorder %v212, 0.0
      %vm222 = vcmp.gt.f32.partialorder %v213, 0.0
      %vm223 = vcmp.gt.f32.partialorder %v214, 0.0
      %vm224 = vcmp.gt.f32.partialorder %v215, 0.0
      %vm225 = vcmp.gt.f32.partialorder %v216, 0.0
      %vm226 = vcmp.gt.f32.partialorder %v217, 0.0
      %v227 = vmul.f32 %v209, 0.2
      %v228 = vmul.f32 %v210, 0.2
      %v229 = vmul.f32 %v211, 0.2
      %v230 = vmul.f32 %v212, 0.2
      %v231 = vmul.f32 %v213, 0.2
      %v232 = vmul.f32 %v214, 0.2
      %v233 = vmul.f32 %v215, 0.2
      %v234 = vmul.f32 %v216, 0.2
      %v235 = vmul.f32 %v217, 0.2
      %v236 = vsel %vm218, %v209, %v227
      %v237 = vsel %vm219, %v210, %v228
      %v238 = vsel %vm220, %v211, %v229
      %v239 = vsel %vm221, %v212, %v230
      %v240 = vsel %vm222, %v213, %v231
      %v241 = vsel %vm223, %v214, %v232
      %v242 = vsel %vm224, %v215, %v233
      %v243 = vsel %vm225, %v216, %v234
      %v244 = vsel %vm226, %v217, %v235
      %245 = vst [vmem:[%s172] sm:$0xff] %v236
      %246 = vst [vmem:[%s172 + $0x8] sm:$0xff] %v237
      %247 = vst [vmem:[%s172 + $0x10] sm:$0xff] %v238
      %248 = vst [vmem:[%s172 + $0x18] sm:$0xff] %v239
      %249 = vst [vmem:[%s172 + $0x20] sm:$0xff] %v240
      %250 = vst [vmem:[%s172 + $0x28] sm:$0xff] %v241
      %251 = vst [vmem:[%s172 + $0x30] sm:$0xff] %v242
      %252 = vst [vmem:[%s172 + $0x38] sm:$0xff] %v243
      %253 = vst [vmem:[%s172 + $0x40] sm:$0xff] %v244
      %s254 = smul.u32 9, %s14
      %p255 = scmp.lt.s32.totalorder %s254, 17
      %s256 = scalar_select %p255, %s254, 17
      %s257 = smul.addr %s256, 8
      %s258 = scalar_lea.vmem %s3, %s257
      // Predicated region
      $region33: #{d_block_forward.3} parent=31 // pred_check
        %p259 = pneg %p100
      $region34: #{d_block_forward.3} parent=31 // pred_check_branch
        %261 = sbr.rel (%p259) target = $region36
      $region35: #{d_block_forward.3} parent=31 // pred_region
        %s262 = smul.u32 9, %s14
      $region36: #{d_block_forward.3} parent=31 // pred_fallthru
        _
    $region32: #{d_block_forward.3} parent=5 // pred_fallthru
      _
    %p263 = scmp.le.s32.totalorder 2, %s9
    // Predicated region
    $region37: #{d_block_forward.3} parent=5 // pred_check
      %p264 = pneg %p263
    $region38: #{d_block_forward.3} parent=5 // pred_check_branch
      %266 = sbr.rel (%p264) target = $region40
    $region39: #{d_block_forward.3} parent=5 // pred_region
      %s267 = ssub.s32 %s9, 2
      // Predicated region
      $region41: #{d_block_forward.3} parent=39 // pred_check
        %p268 = pneg %p106
      $region42: #{d_block_forward.3} parent=39 // pred_check_branch
        %270 = sbr.rel (%p268) target = $region44
      $region43: #{d_block_forward.3} parent=39 // pred_region
        %s271 = smul.u32 9, %s15
        %p272 = scmp.lt.s32.totalorder %s271, 17
        %s273 = scalar_select %p272, %s271, 17
        %s274 = smul.addr %s273, 8
        %s275 = scalar_lea.vmem %s3, %s274
      $region44: #{d_block_forward.3} parent=39 // pred_fallthru
        _
    $region40: #{d_block_forward.3} parent=5 // pred_fallthru
      _
  $region6: #{d_block_forward.3} parent=0 // loop_footer
    %s13 = sadd.s32 1, %s9
  $region7: #{d_block_forward.3} parent=0 // loop_footer_branch
    %8 = sbr.rel target = $region3
  $region8: #{d_block_forward.3} parent=0 // loop_exit
    _

// kernel: d_block_forward.2
$region0: #{d_block_forward.2}
  #allocation0 [shape = 'u32[]', space=smem, size = 0x4, offset = 0x4, fixed_abs, tag = 'smem constant byte address 0x4 - core index']
  #allocation1 [shape = 'u32[72,128]{1,0:T(1,128)}', space=vmem, size = 0x9000, scoped, tag = 'internal scratch']
  %s0 = inlined_call_operand.vmem [shape: bf16[2,88,12], index: 0, kind: input, shape index: {}]
  %s1 = inlined_call_operand.vmem [shape: bf16[4,12,128], index: 1, kind: input, shape index: {}]
  %s2 = inlined_call_operand.vmem [shape: f32[72,1], index: 2, kind: input, shape index: {}]
  %s3 = inlined_call_operand.vmem [shape: bf16[2,72,128], index: 3, kind: output, shape index: {0}]
  %s4 = inlined_call_operand.vmem [shape: f32[2,2,128], index: 4, kind: output, shape index: {1}]
  %5 = xla_tuple %s3, %s4
  %s6 = sld [smem:[#allocation0]]
  $region53: #{d_block_forward.2} parent=0
    _
  %s8 = ssub.s32 1, %s6
  %s9 = scalar_select 0, %s8, %s6
  loop: start=0, step=1, limit=4
  $region2: #{d_block_forward.2} parent=0 // loop_pre_header
    _
  $region3: #{d_block_forward.2} parent=0 // loop_header
    %s11 = sphi 0, %s15
    %p12 = scmp.ge.s32.totalorder %s11, 4
    %s21 = sphi 0, %s23
    %s24 = sphi 0, %s21
    %s25 = sphi 0, %s24
    %s41 = sphi 0, %s25
    %s45 = sphi 0, %s45
    %s47 = sphi 0, %s45
    %s48 = sphi 0, %s47
    %s62 = sphi 0, %s48
    %s66 = sphi 0, %s66
    %s68 = sphi 0, %s66
    %s69 = sphi 0, %s68
    %s83 = sphi 0, %s69
    %s89 = sphi 0, %s91
    %s92 = sphi 0, %s89
    %s93 = sphi 0, %s92
    %s109 = sphi 0, %s93
    %s115 = sphi 0, %s117
    %s118 = sphi 0, %s115
    %s119 = sphi 0, %s118
    %s135 = sphi 0, %s119
  $region4: #{d_block_forward.2} parent=0 // loop_header_branch
    %14 = sbr.rel (%p12) target = $region8
  $region5: #{d_block_forward.2} parent=0 // loop_body
    %s16 = ssub.s32 %s11, 1
    %s17 = ssub.s32 %s11, 2
    %s18 = sadd.s32 %s11, 1
    %s19 = ssub.s32 %s11, %s18
    %p20 = scmp.eq.s32.totalorder %s19, 0
    %s22 = sadd.s32 %s21, 1
    %s23 = scalar_select %p20, %s21, %s22
    %p26 = pneg %p20
    %p27 = scmp.eq.s32.totalorder %s11, 1
    %p28 = por %p26, %p27
    %p29 = scmp.ne.s32.totalorder %s21, %s24
    %p30 = scmp.eq.s32.totalorder %s11, 0
    %p31 = por %p29, %p30
    %p32 = scmp.ne.s32.totalorder %s21, %s24
    %p33 = scmp.eq.s32.totalorder %s16, 1
    %p34 = por %p32, %p33
    %p35 = scmp.ne.s32.totalorder %s24, %s25
    %p36 = scmp.eq.s32.totalorder %s16, 0
    %p37 = por %p35, %p36
    %p38 = scmp.ne.s32.totalorder %s24, %s25
    %p39 = scmp.eq.s32.totalorder %s17, 1
    %p40 = por %p38, %p39
    %p42 = scmp.ne.s32.totalorder %s25, %s41
    %p43 = scmp.eq.s32.totalorder %s17, 0
    %p44 = por %p42, %p43
    %s46 = sadd.s32 %s45, 1
    %p49 = scmp.eq.s32.totalorder %s11, 1
    %p50 = scmp.ne.s32.totalorder %s45, %s47
    %p51 = scmp.eq.s32.totalorder %s11, 0
    %p52 = por %p50, %p51
    %p53 = scmp.ne.s32.totalorder %s45, %s47
    %p54 = scmp.eq.s32.totalorder %s16, 1
    %p55 = por %p53, %p54
    %p56 = scmp.ne.s32.totalorder %s47, %s48
    %p57 = scmp.eq.s32.totalorder %s16, 0
    %p58 = por %p56, %p57
    %p59 = scmp.ne.s32.totalorder %s47, %s48
    %p60 = scmp.eq.s32.totalorder %s17, 1
    %p61 = por %p59, %p60
    %p63 = scmp.ne.s32.totalorder %s48, %s62
    %p64 = scmp.eq.s32.totalorder %s17, 0
    %p65 = por %p63, %p64
    %s67 = sadd.s32 %s66, 1
    %p70 = scmp.eq.s32.totalorder %s11, 1
    %p71 = scmp.ne.s32.totalorder %s66, %s68
    %p72 = scmp.eq.s32.totalorder %s11, 0
    %p73 = por %p71, %p72
    %p74 = scmp.ne.s32.totalorder %s66, %s68
    %p75 = scmp.eq.s32.totalorder %s16, 1
    %p76 = por %p74, %p75
    %p77 = scmp.ne.s32.totalorder %s68, %s69
    %p78 = scmp.eq.s32.totalorder %s16, 0
    %p79 = por %p77, %p78
    %p80 = scmp.ne.s32.totalorder %s68, %s69
    %p81 = scmp.eq.s32.totalorder %s17, 1
    %p82 = por %p80, %p81
    %p84 = scmp.ne.s32.totalorder %s69, %s83
    %p85 = scmp.eq.s32.totalorder %s17, 0
    %p86 = por %p84, %p85
    %s87 = ssub.s32 %s11, %s18
    %p88 = scmp.eq.s32.totalorder %s87, 0
    %s90 = sadd.s32 %s89, 1
    %s91 = scalar_select %p88, %s89, %s90
    %p94 = pneg %p88
    %p95 = scmp.eq.s32.totalorder %s11, 1
    %p96 = por %p94, %p95
    %p97 = scmp.ne.s32.totalorder %s89, %s92
    %p98 = scmp.eq.s32.totalorder %s11, 0
    %p99 = por %p97, %p98
    %p100 = scmp.ne.s32.totalorder %s89, %s92
    %p101 = scmp.eq.s32.totalorder %s16, 1
    %p102 = por %p100, %p101
    %p103 = scmp.ne.s32.totalorder %s92, %s93
    %p104 = scmp.eq.s32.totalorder %s16, 0
    %p105 = por %p103, %p104
    %p106 = scmp.ne.s32.totalorder %s92, %s93
    %p107 = scmp.eq.s32.totalorder %s17, 1
    %p108 = por %p106, %p107
    %p110 = scmp.ne.s32.totalorder %s93, %s109
    %p111 = scmp.eq.s32.totalorder %s17, 0
    %p112 = por %p110, %p111
    %s113 = ssub.s32 %s11, %s18
    %p114 = scmp.eq.s32.totalorder %s113, 0
    %s116 = sadd.s32 %s115, 1
    %s117 = scalar_select %p114, %s115, %s116
    %p120 = pneg %p114
    %p121 = scmp.eq.s32.totalorder %s11, 1
    %p122 = por %p120, %p121
    %p123 = scmp.ne.s32.totalorder %s115, %s118
    %p124 = scmp.eq.s32.totalorder %s11, 0
    %p125 = por %p123, %p124
    %p126 = scmp.ne.s32.totalorder %s115, %s118
    %p127 = scmp.eq.s32.totalorder %s16, 1
    %p128 = por %p126, %p127
    %p129 = scmp.ne.s32.totalorder %s118, %s119
    %p130 = scmp.eq.s32.totalorder %s16, 0
    %p131 = por %p129, %p130
    %p132 = scmp.ne.s32.totalorder %s118, %s119
    %p133 = scmp.eq.s32.totalorder %s17, 1
    %p134 = por %p132, %p133
    %p136 = scmp.ne.s32.totalorder %s119, %s135
    %p137 = scmp.eq.s32.totalorder %s17, 0
    %p138 = por %p136, %p137
    %p139 = scmp.le.s32.totalorder 1, %s11
    %p140 = scmp.lt.s32.totalorder %s11, 3
    %p141 = pnand %p139, %p140
    %p142 = pneg %p141
    // Predicated region
    $region9: #{d_block_forward.2} parent=5 // pred_check
      _
    $region10: #{d_block_forward.2} parent=5 // pred_check_branch
      %144 = sbr.rel (%p141) target = $region12
    $region11: #{d_block_forward.2} parent=5 // pred_region
      %s145 = ssub.s32 %s11, 1
      // Predicated region
      $region13: #{d_block_forward.2} parent=11 // pred_check
        %p146 = pneg %p58
      $region14: #{d_block_forward.2} parent=11 // pred_check_branch
        %148 = sbr.rel (%p146) target = $region16
      $region15: #{d_block_forward.2} parent=11 // pred_region
        _
      $region16: #{d_block_forward.2} parent=11 // pred_fallthru
        _
      // Predicated region
      $region17: #{d_block_forward.2} parent=11 // pred_check
        %p149 = pneg %p79
      $region18: #{d_block_forward.2} parent=11 // pred_check_branch
        %151 = sbr.rel (%p149) target = $region20
      $region19: #{d_block_forward.2} parent=11 // pred_region
        _
      $region20: #{d_block_forward.2} parent=11 // pred_fallthru
        _
    $region12: #{d_block_forward.2} parent=5 // pred_fallthru
      _
    %p152 = scmp.lt.s32.totalorder %s11, 2
    // Predicated region
    $region21: #{d_block_forward.2} parent=5 // pred_check
      %p153 = pneg %p152
    $region22: #{d_block_forward.2} parent=5 // pred_check_branch
      %155 = sbr.rel (%p153) target = $region24
    $region23: #{d_block_forward.2} parent=5 // pred_region
      // Predicated region
      $region25: #{d_block_forward.2} parent=23 // pred_check
        %p156 = pneg %p31
      $region26: #{d_block_forward.2} parent=23 // pred_check_branch
        %158 = sbr.rel (%p156) target = $region28
      $region27: #{d_block_forward.2} parent=23 // pred_region
        %p159 = scmp.lt.s32.totalorder %s11, 1
        %s160 = scalar_select %p159, %s11, 1
        %s161 = smul.addr %s160, 11
        %s162 = smul.addr %s161, 4
        %s163 = scalar_lea.vmem %s0, %s162
      $region28: #{d_block_forward.2} parent=23 // pred_fallthru
        _
    $region24: #{d_block_forward.2} parent=5 // pred_fallthru
      _
    %p164 = scmp.le.s32.totalorder 1, %s11
    %p165 = scmp.lt.s32.totalorder %s11, 3
    %p166 = pnand %p164, %p165
    %p167 = pneg %p166
    // Predicated region
    $region29: #{d_block_forward.2} parent=5 // pred_check
      _
    $region30: #{d_block_forward.2} parent=5 // pred_check_branch
      %169 = sbr.rel (%p166) target = $region32
    $region31: #{d_block_forward.2} parent=5 // pred_region
      %s170 = ssub.s32 %s11, 1
      %p171 = scmp.lt.s32.totalorder %s16, 1
      %s172 = scalar_select %p171, %s16, 1
      %s173 = smul.addr %s172, 11
      %s174 = smul.addr %s173, 4
      %s175 = scalar_lea.vmem %s0, %s174
      %p176 = pneg %p37
      %p177 = pneg %p34
      %p178 = pneg %p58
      %p179 = pneg %p55
      %p180 = pneg %p79
      %p181 = pneg %p76
      %p182 = pneg %p105
      %p183 = pneg %p102
      %p184 = scmp.lt.s32.totalorder %s16, 1
      %s185 = scalar_select %p184, %s16, 1
      %s186 = smul.addr %s185, 9
      %s187 = smul.addr %s186, 4
      %s188 = scalar_lea.vmem %s3, %s187
      %p189 = pneg %p131
      %p190 = pneg %p128
      %p191 = scmp.lt.s32.totalorder %s16, 1
      %s192 = scalar_select %p191, %s16, 1
      %s193 = smul.addr %s192, 2
      %s194 = scalar_lea.vmem %s4, %s193
      %p195 = scmp.lt.s32.totalorder %s16, 1
      %s196 = scalar_select %p195, %s16, 1
      %s197 = smul.addr %s196, 11
      %s198 = smul.addr %s197, 4
      %s199 = scalar_lea.vmem %s0, %s198
      %p200 = scmp.lt.s32.totalorder %s16, 1
      %s201 = scalar_select %p200, %s16, 1
      %s202 = smul.addr %s201, 9
      %s203 = smul.addr %s202, 4
      %s204 = scalar_lea.vmem %s3, %s203
      %p205 = scmp.lt.s32.totalorder %s16, 1
      %s206 = scalar_select %p205, %s16, 1
      %s207 = smul.addr %s206, 2
      %s208 = scalar_lea.vmem %s4, %s207
      %v210 = vld [vmem:[%s2] sm:$0xff]
      %v211 = vld [vmem:[%s2 + $0x8] sm:$0xff]
      %v212 = vld [vmem:[%s2 + $0x10] sm:$0xff]
      %v213 = vld [vmem:[%s2 + $0x18] sm:$0xff]
      %v214 = vld [vmem:[%s2 + $0x20] sm:$0xff]
      %v215 = vld [vmem:[%s2 + $0x28] sm:$0xff]
      %v216 = vld [vmem:[%s2 + $0x30] sm:$0xff]
      %v217 = vld [vmem:[%s2 + $0x38] sm:$0xff]
      %v218 = vld [vmem:[%s2 + $0x40] sm:$0xff]
      %v219 = vld [vmem:[%s199] sm:$0xf]
      %v220 = vld [vmem:[%s199 + $0x4] sm:$0xf]
      %v221 = vld [vmem:[%s199 + $0x8] sm:$0xf]
      %v222 = vld [vmem:[%s199 + $0xc] sm:$0xf]
      %v223 = vld [vmem:[%s199 + $0x10] sm:$0xf]
      %v224 = vld [vmem:[%s199 + $0x14] sm:$0xf]
      %v225 = vld [vmem:[%s199 + $0x18] sm:$0xf]
      %v226 = vld [vmem:[%s199 + $0x1c] sm:$0xf]
      %v227 = vld [vmem:[%s199 + $0x20] sm:$0xf]
      %v228 = vld [vmem:[%s1] sm:$0xf]
      %v229 = vld [vmem:[%s1 + $0x4] sm:$0x3]
      %v230 = vld [vmem:[%s199 + $0x24] sm:$0x1]
      %s231 = scalar_lea.vmem %s1, 8
      %v232 = vld [vmem:[%s231] sm:$0xf]
      %v233 = vld [vmem:[%s231 + $0x4] sm:$0x3]
      %v244 = vunpack.c.l.b16 %v219
      %v245 = vunpack.c.l.b16 %v220
      %v246 = vunpack.c.l.b16 %v221
      %v247 = vunpack.c.l.b16 %v222
      %v248 = vunpack.c.l.b16 %v223
      %v249 = vunpack.c.l.b16 %v224
      %v250 = vunpack.c.l.b16 %v225
      %v251 = vunpack.c.l.b16 %v226
      %v252 = vunpack.c.l.b16 %v227
      %v253 = vunpack.c.l.b16 %v230
      %v254 = vpack.c.b16 %v245, %v244
      %v255 = vpack.c.b16 %v247, %v246
      %v256 = vpack.c.b16 %v249, %v248
      %v257 = vpack.c.b16 %v251, %v250
      %v258 = vpack.c.b16 %v253, %v252
      %vm259 = vsmask.f32 7424
      %v261 = vshrl.u32 %v254, 16
      %v263 = vshll.u32 %v254, 16
      %v265 = vrot.slane %v263, 1
      %v266 = vor.u32 %v261, %v265
      %v268 = vshll.u32 %v255, 16
      %v270 = vrot.slane %v268, 1
      %v271 = vsel %vm259, %v266, %v270
      %v272 = vshrl.u32 %v255, 16
      %v274 = vor.u32 %v272, %v270
      %v276 = vshll.u32 %v256, 16
      %v278 = vrot.slane %v276, 1
      %v279 = vsel %vm259, %v274, %v278
      %v280 = vshrl.u32 %v256, 16
      %v282 = vor.u32 %v280, %v278
      %v284 = vshll.u32 %v257, 16
      %v286 = vrot.slane %v284, 1
      %v287 = vsel %vm259, %v282, %v286
      %v288 = vshrl.u32 %v257, 16
      %v290 = vor.u32 %v288, %v286
      %v292 = vshll.u32 %v258, 16
      %v294 = vrot.slane %v292, 1
      %v295 = vsel %vm259, %v290, %v294
      %v296 = vshrl.u32 %v258, 16
      %v298 = vor.u32 %v296, %v294
      %v301 = vunpack.c.l.b16 %v232
      %v302 = vunpack.c.l.b16 %v233
      %v303 = vpack.c.b16 %v302, %v301
      %vm304 = vcmask 97280
      %v306 = vsel %vm304, %v271, 0
      %v309 = vsel %vm304, %v279, 0
      %v312 = vsel %vm304, %v287, 0
      %v315 = vsel %vm304, %v295, 0
      %v318 = vsel %vm304, %v298, 0
      %vm320 = vcmask 1045504
      %v322 = vsel %vm320, %v303, 0
      %324 = vmatpush.bf16.msra.mxu0 0
      %325 = vmatpush.bf16.msra.mxu0 0
      %326 = vmatpush.bf16.msra.mxu0 0
      %327 = vmatpush.bf16.msra.mxu0 0
      %328 = vmatpush.bf16.msra.mxu0 0
      %329 = vmatpush.bf16.msra.mxu0 0
      %330 = vmatpush.bf16.msra.mxu0 0
      %331 = vmatpush.bf16.msra.mxu0 %v322
      %332 = vmatmul.bf16.gmra.mxu0 %v306
      %v333 = vpop.f32.mrf.mxu0
      %v334 = vadd.f32 0.0, %v333
      %v335 = vpop.f32.mrf.mxu0
      %v336 = vadd.f32 0.0, %v335
      %337 = vmatmul.bf16.gmra.mxu0 %v309
      %v338 = vpop.f32.mrf.mxu0
      %v339 = vadd.f32 0.0, %v338
      %v340 = vpop.f32.mrf.mxu0
      %v341 = vadd.f32 0.0, %v340
      %342 = vmatmul.bf16.gmra.mxu0 %v312
      %v343 = vpop.f32.mrf.mxu0
      %v344 = vadd.f32 0.0, %v343
      %v345 = vpop.f32.mrf.mxu0
      %v346 = vadd.f32 0.0, %v345
      %347 = vmatmul.bf16.gmra.mxu0 %v315
      %v348 = vpop.f32.mrf.mxu0
      %v349 = vadd.f32 0.0, %v348
      %v350 = vpop.f32.mrf.mxu0
      %v351 = vadd.f32 0.0, %v350
      %352 = vmatmul.bf16.gmra.mxu0 %v318
      %v353 = vpop.f32.mrf.mxu0
      %v354 = vadd.f32 0.0, %v353
      %v355 = vpop.f32.mrf.mxu0
      %356 = vdwg.mxu0
      %v357 = vpack.c.b16 %v252, %v252
      %v360 = vunpack.c.l.b16 %v228
      %v361 = vunpack.c.l.b16 %v229
      %v362 = vpack.c.b16 %v361, %v360
      %v363 = vsel %vm304, %v254, 0
      %v365 = vsel %vm304, %v255, 0
      %v367 = vsel %vm304, %v256, 0
      %v369 = vsel %vm304, %v257, 0
      %v372 = vsel %vm304, %v357, 0
      %v375 = vsel %vm320, %v362, 0
      %377 = vmatpush.bf16.msra.mxu0 0
      %378 = vmatpush.bf16.msra.mxu0 0
      %379 = vmatpush.bf16.msra.mxu0 0
      %380 = vmatpush.bf16.msra.mxu0 0
      %381 = vmatpush.bf16.msra.mxu0 0
      %382 = vmatpush.bf16.msra.mxu0 0
      %383 = vmatpush.bf16.msra.mxu0 0
      %384 = vmatpush.bf16.msra.mxu0 %v375
      %385 = vmatmul.bf16.gmra.mxu0 %v363
      %v386 = vpop.f32.mrf.mxu0
      %v387 = vadd.f32 %v334, %v386
      %v388 = vpop.f32.mrf.mxu0
      %v389 = vadd.f32 %v336, %v388
      %390 = vmatmul.bf16.gmra.mxu0 %v365
      %v391 = vpop.f32.mrf.mxu0
      %v392 = vadd.f32 %v339, %v391
      %v393 = vpop.f32.mrf.mxu0
      %v394 = vadd.f32 %v341, %v393
      %395 = vmatmul.bf16.gmra.mxu0 %v367
      %v396 = vpop.f32.mrf.mxu0
      %v397 = vadd.f32 %v344, %v396
      %v398 = vpop.f32.mrf.mxu0
      %v399 = vadd.f32 %v346, %v398
      %400 = vmatmul.bf16.gmra.mxu0 %v369
      %v401 = vpop.f32.mrf.mxu0
      %v402 = vadd.f32 %v349, %v401
      %v403 = vpop.f32.mrf.mxu0
      %v404 = vadd.f32 %v351, %v403
      %405 = vmatmul.bf16.gmra.mxu0 %v372
      %v406 = vpop.f32.mrf.mxu0
      %v407 = vadd.f32 %v354, %v406
      %v408 = vpop.f32.mrf.mxu0
      %409 = vdwg.mxu0
      %v410 = vld [vmem:[%s199 + $0x4] sm:$0xf]
      %v411 = vld [vmem:[%s199 + $0x8] sm:$0xf]
      %v412 = vld [vmem:[%s199 + $0xc] sm:$0xf]
      %v413 = vld [vmem:[%s199 + $0x10] sm:$0xf]
      %v414 = vld [vmem:[%s199 + $0x14] sm:$0xf]
      %v415 = vld [vmem:[%s199 + $0x18] sm:$0xf]
      %v416 = vld [vmem:[%s199 + $0x1c] sm:$0xf]
      %v417 = vld [vmem:[%s199 + $0x20] sm:$0xf]
      %v418 = vld [vmem:[%s199 + $0x24] sm:$0xf]
      %v419 = vld [vmem:[%s199 + $0x28] sm:$0x1]
      %s420 = scalar_lea.vmem %s1, 16
      %v421 = vld [vmem:[%s420] sm:$0xf]
      %v422 = vld [vmem:[%s420 + $0x4] sm:$0x3]
      %v433 = vunpack.c.l.b16 %v410
      %v434 = vunpack.c.l.b16 %v411
      %v435 = vunpack.c.l.b16 %v412
      %v436 = vunpack.c.l.b16 %v413
      %v437 = vunpack.c.l.b16 %v414
      %v438 = vunpack.c.l.b16 %v415
      %v439 = vunpack.c.l.b16 %v416
      %v440 = vunpack.c.l.b16 %v417
      %v441 = vunpack.c.l.b16 %v418
      %v442 = vunpack.c.l.b16 %v419
      %v443 = vpack.c.b16 %v434, %v433
      %v444 = vpack.c.b16 %v436, %v435
      %v445 = vpack.c.b16 %v438, %v437
      %v446 = vpack.c.b16 %v440, %v439
      %v447 = vpack.c.b16 %v442, %v441
      %v449 = vshrl.u32 %v443, 16
      %v451 = vshll.u32 %v443, 16
      %v453 = vrot.slane %v451, 1
      %v454 = vor.u32 %v449, %v453
      %v456 = vshll.u32 %v444, 16
      %v458 = vrot.slane %v456, 1
      %v459 = vsel %vm259, %v454, %v458
      %v460 = vshrl.u32 %v444, 16
      %v462 = vor.u32 %v460, %v458
      %v464 = vshll.u32 %v445, 16
      %v466 = vrot.slane %v464, 1
      %v467 = vsel %vm259, %v462, %v466
      %v468 = vshrl.u32 %v445, 16
      %v470 = vor.u32 %v468, %v466
      %v472 = vshll.u32 %v446, 16
      %v474 = vrot.slane %v472, 1
      %v475 = vsel %vm259, %v470, %v474
      %v476 = vshrl.u32 %v446, 16
      %v478 = vor.u32 %v476, %v474
      %v480 = vshll.u32 %v447, 16
      %v482 = vrot.slane %v480, 1
      %v483 = vsel %vm259, %v478, %v482
      %v484 = vshrl.u32 %v447, 16
      %v486 = vor.u32 %v484, %v482
      %v489 = vunpack.c.l.b16 %v421
      %v490 = vunpack.c.l.b16 %v422
      %v491 = vpack.c.b16 %v490, %v489
      %v493 = vsel %vm304, %v459, 0
      %v496 = vsel %vm304, %v467, 0
      %v499 = vsel %vm304, %v475, 0
      %v502 = vsel %vm304, %v483, 0
      %v505 = vsel %vm304, %v486, 0
      %v508 = vsel %vm320, %v491, 0
      %510 = vmatpush.bf16.msra.mxu0 0
      %511 = vmatpush.bf16.msra.mxu0 0
      %512 = vmatpush.bf16.msra.mxu0 0
      %513 = vmatpush.bf16.msra.mxu0 0
      %514 = vmatpush.bf16.msra.mxu0 0
      %515 = vmatpush.bf16.msra.mxu0 0
      %516 = vmatpush.bf16.msra.mxu0 0
      %517 = vmatpush.bf16.msra.mxu0 %v508
      %518 = vmatmul.bf16.gmra.mxu0 %v493
      %v519 = vpop.f32.mrf.mxu0
      %v520 = vadd.f32 0.0, %v519
      %v521 = vpop.f32.mrf.mxu0
      %v522 = vadd.f32 0.0, %v521
      %523 = vmatmul.bf16.gmra.mxu0 %v496
      %v524 = vpop.f32.mrf.mxu0
      %v525 = vadd.f32 0.0, %v524
      %v526 = vpop.f32.mrf.mxu0
      %v527 = vadd.f32 0.0, %v526
      %528 = vmatmul.bf16.gmra.mxu0 %v499
      %v529 = vpop.f32.mrf.mxu0
      %v530 = vadd.f32 0.0, %v529
      %v531 = vpop.f32.mrf.mxu0
      %v532 = vadd.f32 0.0, %v531
      %533 = vmatmul.bf16.gmra.mxu0 %v502
      %v534 = vpop.f32.mrf.mxu0
      %v535 = vadd.f32 0.0, %v534
      %v536 = vpop.f32.mrf.mxu0
      %v537 = vadd.f32 0.0, %v536
      %538 = vmatmul.bf16.gmra.mxu0 %v505
      %v539 = vpop.f32.mrf.mxu0
      %v540 = vadd.f32 0.0, %v539
      %v541 = vpop.f32.mrf.mxu0
      %542 = vdwg.mxu0
      %v543 = vadd.f32 %v387, %v520
      %v544 = vadd.f32 %v389, %v522
      %v545 = vadd.f32 %v392, %v525
      %v546 = vadd.f32 %v394, %v527
      %v547 = vadd.f32 %v397, %v530
      %v548 = vadd.f32 %v399, %v532
      %v549 = vadd.f32 %v402, %v535
      %v550 = vadd.f32 %v404, %v537
      %v551 = vadd.f32 %v407, %v540
      %v552 = vld [vmem:[%s199 + $0x4] sm:$0xe]
      %s553 = scalar_lea.vmem %s1, 24
      %v554 = vld [vmem:[%s553] sm:$0xf]
      %v555 = vld [vmem:[%s553 + $0x4] sm:$0x3]
      %v557 = vunpack.c.l.b16 %v552
      %v558 = vpack.c.b16 %v434, %v557
      %vm559 = vcmask 1046528
      %v560 = vrot.slane %v558, 1
      %v561 = vrot.slane %v444, 1
      %v562 = vsel %vm559, %v560, %v561
      %v563 = vrot.slane %v445, 1
      %v564 = vsel %vm559, %v561, %v563
      %v565 = vrot.slane %v446, 1
      %v566 = vsel %vm559, %v563, %v565
      %v567 = vrot.slane %v447, 1
      %v568 = vsel %vm559, %v565, %v567
      %v571 = vunpack.c.l.b16 %v554
      %v572 = vunpack.c.l.b16 %v555
      %v573 = vpack.c.b16 %v572, %v571
      %v575 = vsel %vm304, %v562, 0
      %v578 = vsel %vm304, %v564, 0
      %v581 = vsel %vm304, %v566, 0
      %v584 = vsel %vm304, %v568, 0
      %v587 = vsel %vm304, %v567, 0
      %v590 = vsel %vm320, %v573, 0
      %592 = vmatpush.bf16.msra.mxu0 0
      %593 = vmatpush.bf16.msra.mxu0 0
      %594 = vmatpush.bf16.msra.mxu0 0
      %595 = vmatpush.bf16.msra.mxu0 0
      %596 = vmatpush.bf16.msra.mxu0 0
      %597 = vmatpush.bf16.msra.mxu0 0
      %598 = vmatpush.bf16.msra.mxu0 0
      %599 = vmatpush.bf16.msra.mxu0 %v590
      %600 = vmatmul.bf16.gmra.mxu0 %v575
      %v601 = vpop.f32.mrf.mxu0
      %v602 = vadd.f32 0.0, %v601
      %v603 = vpop.f32.mrf.mxu0
      %v604 = vadd.f32 0.0, %v603
      %605 = vmatmul.bf16.gmra.mxu0 %v578
      %v606 = vpop.f32.mrf.mxu0
      %v607 = vadd.f32 0.0, %v606
      %v608 = vpop.f32.mrf.mxu0
      %v609 = vadd.f32 0.0, %v608
      %610 = vmatmul.bf16.gmra.mxu0 %v581
      %v611 = vpop.f32.mrf.mxu0
      %v612 = vadd.f32 0.0, %v611
      %v613 = vpop.f32.mrf.mxu0
      %v614 = vadd.f32 0.0, %v613
      %615 = vmatmul.bf16.gmra.mxu0 %v584
      %v616 = vpop.f32.mrf.mxu0
      %v617 = vadd.f32 0.0, %v616
      %v618 = vpop.f32.mrf.mxu0
      %v619 = vadd.f32 0.0, %v618
      %620 = vmatmul.bf16.gmra.mxu0 %v587
      %v621 = vpop.f32.mrf.mxu0
      %v622 = vadd.f32 0.0, %v621
      %v623 = vpop.f32.mrf.mxu0
      %624 = vdwg.mxu0
      %v625 = vadd.f32 %v543, %v602
      %v626 = vadd.f32 %v544, %v604
      %v627 = vadd.f32 %v545, %v607
      %v628 = vadd.f32 %v546, %v609
      %v629 = vadd.f32 %v547, %v612
      %v630 = vadd.f32 %v548, %v614
      %v631 = vadd.f32 %v549, %v617
      %v632 = vadd.f32 %v550, %v619
      %v633 = vadd.f32 %v551, %v622
      %v634 = vpack.c.bf16 %v625, %v625
      %v635 = vpack.c.bf16 %v626, %v626
      %v636 = vpack.c.bf16 %v627, %v627
      %v637 = vpack.c.bf16 %v628, %v628
      %v638 = vpack.c.bf16 %v629, %v629
      %v639 = vpack.c.bf16 %v630, %v630
      %v640 = vpack.c.bf16 %v631, %v631
      %v641 = vpack.c.bf16 %v632, %v632
      %v642 = vpack.c.bf16 %v633, %v633
      %643 = vst [vmem:[%s204] sm:$0xf] %v634
      %644 = vst [vmem:[%s204 + $0x4] sm:$0xf] %v635
      %645 = vst [vmem:[%s204 + $0x8] sm:$0xf] %v636
      %646 = vst [vmem:[%s204 + $0xc] sm:$0xf] %v637
      %647 = vst [vmem:[%s204 + $0x10] sm:$0xf] %v638
      %648 = vst [vmem:[%s204 + $0x14] sm:$0xf] %v639
      %649 = vst [vmem:[%s204 + $0x18] sm:$0xf] %v640
      %650 = vst [vmem:[%s204 + $0x1c] sm:$0xf] %v641
      %651 = vst [vmem:[%s204 + $0x20] sm:$0xf] %v642
      %653 = vset.pattern.permute.xlu0 0
      %654 = vperm.xlu0 %653, %v210
      %v655 = vpop.permute.xlu0 %654
      %658 = vset.pattern.permute.xlu0 0
      %659 = vperm.xlu0 %658, %v211
      %v660 = vpop.permute.xlu0 %659
      %663 = vset.pattern.permute.xlu0 0
      %664 = vperm.xlu0 %663, %v212
      %v665 = vpop.permute.xlu0 %664
      %668 = vset.pattern.permute.xlu0 0
      %669 = vperm.xlu0 %668, %v213
      %v670 = vpop.permute.xlu0 %669
      %673 = vset.pattern.permute.xlu0 0
      %674 = vperm.xlu0 %673, %v214
      %v675 = vpop.permute.xlu0 %674
      %678 = vset.pattern.permute.xlu0 0
      %679 = vperm.xlu0 %678, %v215
      %v680 = vpop.permute.xlu0 %679
      %683 = vset.pattern.permute.xlu0 0
      %684 = vperm.xlu0 %683, %v216
      %v685 = vpop.permute.xlu0 %684
      %688 = vset.pattern.permute.xlu0 0
      %689 = vperm.xlu0 %688, %v217
      %v690 = vpop.permute.xlu0 %689
      %693 = vset.pattern.permute.xlu0 0
      %694 = vperm.xlu0 %693, %v218
      %v695 = vpop.permute.xlu0 %694
      %v697 = vmul.f32 %v625, %v655
      %v698 = vmul.f32 %v626, %v660
      %v699 = vmul.f32 %v627, %v665
      %v700 = vmul.f32 %v628, %v670
      %v701 = vmul.f32 %v629, %v675
      %v702 = vmul.f32 %v630, %v680
      %v703 = vmul.f32 %v631, %v685
      %v704 = vmul.f32 %v632, %v690
      %v705 = vmul.f32 %v633, %v695
      %v706 = vadd.f32 %v697, %v698
      %v707 = vadd.f32 %v706, %v699
      %v708 = vadd.f32 %v707, %v700
      %v709 = vadd.f32 %v708, %v701
      %v710 = vadd.f32 %v709, %v702
      %v711 = vadd.f32 %v710, %v703
      %v712 = vadd.f32 %v711, %v704
      %v713 = vadd.f32 %v712, %v705
      %v714 = vrot.slane %v713, 4
      %v715 = vadd.f32 %v713, %v714
      %v716 = vrot.slane %v715, 2
      %v717 = vadd.f32 %v715, %v716
      %v718 = vrot.slane %v717, 1
      %v719 = vadd.f32 %v717, %v718
      %v720 = vadd.f32 %v719, 0.0
      %v721 = vmul.f32 %v697, %v625
      %v722 = vmul.f32 %v698, %v626
      %v723 = vmul.f32 %v699, %v627
      %v724 = vmul.f32 %v700, %v628
      %v725 = vmul.f32 %v701, %v629
      %v726 = vmul.f32 %v702, %v630
      %v727 = vmul.f32 %v703, %v631
      %v728 = vmul.f32 %v704, %v632
      %v729 = vmul.f32 %v705, %v633
      %v730 = vadd.f32 %v721, %v722
      %v731 = vadd.f32 %v730, %v723
      %v732 = vadd.f32 %v731, %v724
      %v733 = vadd.f32 %v732, %v725
      %v734 = vadd.f32 %v733, %v726
      %v735 = vadd.f32 %v734, %v727
      %v736 = vadd.f32 %v735, %v728
      %v737 = vadd.f32 %v736, %v729
      %v738 = vrot.slane %v737, 4
      %v739 = vadd.f32 %v737, %v738
      %v740 = vrot.slane %v739, 2
      %v741 = vadd.f32 %v739, %v740
      %v742 = vrot.slane %v741, 1
      %v743 = vadd.f32 %v741, %v742
      %v744 = vadd.f32 %v743, 0.0
      %745 = vst [vmem:[%s208] sm:$0x1] %v720
      %746 = vst [vmem:[%s208 + $0x1] sm:$0x1] %v744
      %p747 = scmp.lt.s32.totalorder %s16, 1
      %s748 = scalar_select %p747, %s16, 1
      %s749 = smul.addr %s748, 9
      %s750 = smul.addr %s749, 4
      %s751 = scalar_lea.vmem %s3, %s750
      %p752 = scmp.lt.s32.totalorder %s16, 1
      %s753 = scalar_select %p752, %s16, 1
      %s754 = smul.addr %s753, 2
      %s755 = scalar_lea.vmem %s4, %s754
      // Predicated region
      $region33: #{d_block_forward.2} parent=31 // pred_check
        %p756 = pneg %p102
      $region34: #{d_block_forward.2} parent=31 // pred_check_branch
        %758 = sbr.rel (%p756) target = $region36
      $region35: #{d_block_forward.2} parent=31 // pred_region
        _
      $region36: #{d_block_forward.2} parent=31 // pred_fallthru
        _
      // Predicated region
      $region37: #{d_block_forward.2} parent=31 // pred_check
        %p759 = pneg %p128
      $region38: #{d_block_forward.2} parent=31 // pred_check_branch
        %761 = sbr.rel (%p759) target = $region40
      $region39: #{d_block_forward.2} parent=31 // pred_region
        _
      $region40: #{d_block_forward.2} parent=31 // pred_fallthru
        _
    $region32: #{d_block_forward.2} parent=5 // pred_fallthru
      _
    %p762 = scmp.le.s32.totalorder 2, %s11
    // Predicated region
    $region41: #{d_block_forward.2} parent=5 // pred_check
      %p763 = pneg %p762
    $region42: #{d_block_forward.2} parent=5 // pred_check_branch
      %765 = sbr.rel (%p763) target = $region44
    $region43: #{d_block_forward.2} parent=5 // pred_region
      %s766 = ssub.s32 %s11, 2
      // Predicated region
      $region45: #{d_block_forward.2} parent=43 // pred_check
        %p767 = pneg %p108
      $region46: #{d_block_forward.2} parent=43 // pred_check_branch
        %769 = sbr.rel (%p767) target = $region48
      $region47: #{d_block_forward.2} parent=43 // pred_region
        %p770 = scmp.lt.s32.totalorder %s17, 1
        %s771 = scalar_select %p770, %s17, 1
        %s772 = smul.addr %s771, 9
        %s773 = smul.addr %s772, 4
        %s774 = scalar_lea.vmem %s3, %s773
      $region48: #{d_block_forward.2} parent=43 // pred_fallthru
        _
      // Predicated region
      $region49: #{d_block_forward.2} parent=43 // pred_check
        %p775 = pneg %p134
      $region50: #{d_block_forward.2} parent=43 // pred_check_branch
        %777 = sbr.rel (%p775) target = $region52
      $region51: #{d_block_forward.2} parent=43 // pred_region
        %p778 = scmp.lt.s32.totalorder %s17, 1
        %s779 = scalar_select %p778, %s17, 1
        %s780 = smul.addr %s779, 2
        %s781 = scalar_lea.vmem %s4, %s780
      $region52: #{d_block_forward.2} parent=43 // pred_fallthru
        _
    $region44: #{d_block_forward.2} parent=5 // pred_fallthru
      _
  $region6: #{d_block_forward.2} parent=0 // loop_footer
    %s15 = sadd.s32 1, %s11
  $region7: #{d_block_forward.2} parent=0 // loop_footer_branch
    %10 = sbr.rel target = $region3
  $region8: #{d_block_forward.2} parent=0 // loop_exit
    _

</llo_original>
